<compile_context>
chip_gen: v7x
topology: tpu7x:2x2x1
jax: 0.10.0
libtpu: 0.0.40
codegen_flags: <defaults>
</compile_context>

<pallas_src>
import math

import jax
import jax.numpy as jnp
from jax import lax
from jax.experimental import pallas as pl
from jax.experimental.pallas import tpu as pltpu


# ----------------------------------------------------------------------------
# Kernels
# ----------------------------------------------------------------------------
def encoder_reparam_kernel(x_ref, len_ref, eps_ref,
                           wih_ref, whh_ref, bih_ref, bhh_ref,
                           wm_ref, bm_ref, wv_ref, bv_ref, wl_ref, bl_ref,
                           mean_ref, logv_ref, z_ref, hdec_ref,
                           gi_scr):
    # x_ref:   (S*B, E)  time-major flattened embedded input (row s*B + b)
    # len_ref: (B, 1)    int32 sequence lengths (sorted descending)
    # wih_ref: (E, 3H), whh_ref: (H, 3H), bih_ref/bhh_ref: (1, 3H)
    # wm/wv:   (H, L), wl: (L, H); outputs mean/logv/z: (B, L), hdec: (B, H)
    H = whh_ref.shape[0]
    B = len_ref.shape[0]
    S = x_ref.shape[0] // B

    # --- Hoisted input projection: one big matmul instead of S tiny ones. ---
    gi_scr[...] = (jnp.dot(x_ref[...], wih_ref[...],
                           preferred_element_type=jnp.float32) + bih_ref[...])

    # Loop-invariant values hoisted out of the recurrence (live in vregs).
    lengths = len_ref[...]                       # (B, 1)
    whh = whh_ref[...]                           # (H, 3H)
    bhh = bhh_ref[...]                           # (1, 3H)

    def step(t, h):                              # h carried in vregs
        row = pl.multiple_of(t * B, B)
        gi = gi_scr[pl.ds(row, B), :]            # (B, 3H)
        gh = jnp.dot(h, whh, preferred_element_type=jnp.float32) + bhh
        r = jax.nn.sigmoid(gi[:, 0:H] + gh[:, 0:H])
        zg = jax.nn.sigmoid(gi[:, H:2 * H] + gh[:, H:2 * H])
        n = jnp.tanh(gi[:, 2 * H:3 * H] + r * gh[:, 2 * H:3 * H])
        h_new = (1.0 - zg) * n + zg * h
        # packed-sequence semantics: freeze h once t >= length
        return jnp.where(t < lengths, h_new, h)

    h_enc = lax.fori_loop(0, S, step, jnp.zeros((B, H), jnp.float32))

    # --- Fused reparameterization + latent2hidden (encoder finalize). ---
    mean = jnp.dot(h_enc, wm_ref[...], preferred_element_type=jnp.float32) + bm_ref[...]
    logv = jnp.dot(h_enc, wv_ref[...], preferred_element_type=jnp.float32) + bv_ref[...]
    std = jnp.exp(0.5 * logv)
    z = eps_ref[...] * std + mean
    hdec = jnp.dot(z, wl_ref[...], preferred_element_type=jnp.float32) + bl_ref[...]
    mean_ref[...] = mean
    logv_ref[...] = logv
    z_ref[...] = z
    hdec_ref[...] = hdec


def decoder_gru_kernel(x_ref, len_ref, h0_ref, wih_ref, whh_ref, bih_ref, bhh_ref,
                       out_ref, gi_scr):
    # x_ref: (S*B, E), h0_ref: (B, H), out_ref: (S*B, H) time-major flattened.
    # Padded positions (t >= length) produce zeros, matching pad_packed_sequence.
    H = whh_ref.shape[0]
    B = len_ref.shape[0]
    S = x_ref.shape[0] // B

    gi_scr[...] = (jnp.dot(x_ref[...], wih_ref[...],
                           preferred_element_type=jnp.float32) + bih_ref[...])

    lengths = len_ref[...]
    whh = whh_ref[...]
    bhh = bhh_ref[...]

    def step(t, h):
        row = pl.multiple_of(t * B, B)
        gi = gi_scr[pl.ds(row, B), :]
        gh = jnp.dot(h, whh, preferred_element_type=jnp.float32) + bhh
        r = jax.nn.sigmoid(gi[:, 0:H] + gh[:, 0:H])
        zg = jax.nn.sigmoid(gi[:, H:2 * H] + gh[:, H:2 * H])
        n = jnp.tanh(gi[:, 2 * H:3 * H] + r * gh[:, 2 * H:3 * H])
        h_new = (1.0 - zg) * n + zg * h
        valid = t < lengths
        out_ref[pl.ds(row, B), :] = jnp.where(valid, h_new, jnp.zeros_like(h_new))
        return jnp.where(valid, h_new, h)

    lax.fori_loop(0, S, step, h0_ref[...])


def vocab_logsoftmax_kernel(x_ref, w_ref, b_ref, out_ref):
    # x_ref: (TILE_N, H), w_ref: (H, V) resident, b_ref: (1, V), out_ref: (TILE_N, V)
    logits = jnp.dot(x_ref[...], w_ref[...], preferred_element_type=jnp.float32) + b_ref[...]
    m = jnp.max(logits, axis=-1, keepdims=True)
    lse = jnp.log(jnp.sum(jnp.exp(logits - m), axis=-1, keepdims=True)) + m
    out_ref[...] = logits - lse


# ----------------------------------------------------------------------------
# Pallas wrappers
# ----------------------------------------------------------------------------
_VMEM = pl.BlockSpec(memory_space=pltpu.MemorySpace.VMEM)


def run_encoder_reparam(x_tm, len_b1, eps, params, S, B):
    H = params["enc_whh_t"].shape[0]
    L = params["wm_t"].shape[1]
    out_shapes = (
        jax.ShapeDtypeStruct((B, L), jnp.float32),   # mean
        jax.ShapeDtypeStruct((B, L), jnp.float32),   # logv
        jax.ShapeDtypeStruct((B, L), jnp.float32),   # z
        jax.ShapeDtypeStruct((B, H), jnp.float32),   # decoder h0
    )
    return pl.pallas_call(
        encoder_reparam_kernel,
        out_shape=out_shapes,
        in_specs=[_VMEM] * 13,
        out_specs=(_VMEM,) * 4,
        scratch_shapes=[pltpu.VMEM((S * B, 3 * H), jnp.float32)],
    )(x_tm, len_b1, eps,
      params["enc_wih_t"], params["enc_whh_t"], params["enc_bih"], params["enc_bhh"],
      params["wm_t"], params["bm"], params["wv_t"], params["bv"],
      params["wl_t"], params["bl"])


def run_decoder(x_tm, len_b1, h0, params, S, B):
    H = params["dec_whh_t"].shape[0]
    return pl.pallas_call(
        decoder_gru_kernel,
        out_shape=jax.ShapeDtypeStruct((S * B, H), jnp.float32),
        in_specs=[_VMEM] * 7,
        out_specs=_VMEM,
        scratch_shapes=[pltpu.VMEM((S * B, 3 * H), jnp.float32)],
    )(x_tm, len_b1, h0,
      params["dec_wih_t"], params["dec_whh_t"], params["dec_bih"], params["dec_bhh"])


def run_vocab(x_flat, w_voc_t, b_voc):
    # Row-tiled vocab projection + log_softmax; (H, V) weight stays resident.
    N, H = x_flat.shape
    V = w_voc_t.shape[1]
    tile_n = min(512, ((N + 7) // 8) * 8)
    n_tiles = pl.cdiv(N, tile_n)
    n_pad = n_tiles * tile_n
    if n_pad != N:
        x_flat = jnp.pad(x_flat, ((0, n_pad - N), (0, 0)))

    out = pl.pallas_call(
        vocab_logsoftmax_kernel,
        out_shape=jax.ShapeDtypeStruct((n_pad, V), jnp.float32),
        grid=(n_tiles,),
        in_specs=[pl.BlockSpec((tile_n, H), lambda i: (i, 0)),
                  pl.BlockSpec((H, V), lambda i: (0, 0)),
                  pl.BlockSpec((1, V), lambda i: (0, 0))],
        out_specs=pl.BlockSpec((tile_n, V), lambda i: (i, 0)),
        compiler_params=pltpu.CompilerParams(dimension_semantics=("parallel",)),
    )(x_flat, w_voc_t, b_voc)
    return out[:N]


# ----------------------------------------------------------------------------
# SentenceVAE forward (glue in plain JAX, hot path in Pallas kernels)
# ----------------------------------------------------------------------------
def sentence_vae_forward(params, input_sequence, length, eps):
    B, S = input_sequence.shape

    # sort sequences by length descending (pack_padded_sequence requirement)
    sorted_idx = jnp.argsort(-length)
    sorted_lengths = length[sorted_idx]
    reversed_idx = jnp.argsort(sorted_idx)
    inp_sorted = input_sequence[sorted_idx]

    # embedding lookup (glue; XLA fuses the gather with the layout change below)
    emb = params["embedding"][inp_sorted]                     # (B, S, E)
    E = emb.shape[-1]
    # time-major flattened layout: row s*B + b  <->  (timestep s, batch b)
    x_tm = jnp.transpose(emb, (1, 0, 2)).reshape(S * B, E)
    len_b1 = sorted_lengths.reshape(B, 1).astype(jnp.int32)

    H = params["enc_whh_t"].shape[0]

    # encoder GRU + reparameterization + latent2hidden, fused in one kernel
    mean, logv, z, h_dec0 = run_encoder_reparam(x_tm, len_b1, eps, params, S, B)

    # word_dropout_rate = 0 and embedding dropout p = 0 -> decoder reuses the
    # same embedded input.
    dec_out_tm = run_decoder(x_tm, len_b1, h_dec0, params, S, B)   # (S*B, H)
    dec_out = jnp.transpose(dec_out_tm.reshape(S, B, H), (1, 0, 2))  # (B, S, H)
    dec_out = dec_out[reversed_idx]                                  # undo the sort

    V = params["w_voc_t"].shape[1]
    logp_flat = run_vocab(dec_out.reshape(B * S, H), params["w_voc_t"], params["b_voc"])
    logp = logp_flat.reshape(B, S, V)

    # matches the PyTorch return signature (logp, mean, logv, None, z, None)
    # (mean/logv/z are in sorted order, exactly as in the PyTorch forward)
    return logp, mean, logv, None, z, None


# ----------------------------------------------------------------------------
# Deterministic parameter construction
# ----------------------------------------------------------------------------
def make_params(key, V, E, H, L):
    ks = jax.random.split(key, 32)
    it = iter(range(32))

    def u(shape, scale):
        return jax.random.uniform(ks[next(it)], shape, jnp.float32, -scale, scale)

    sc_rnn = 1.0 / math.sqrt(H)
    params = {
        "embedding": jax.random.normal(ks[next(it)], (V, E), jnp.float32) * 0.1,
        # encoder GRU (PyTorch weight_ih_l0: (3H, E) -> transposed to (E, 3H))
        "enc_wih_t": u((E, 3 * H), sc_rnn),
        "enc_whh_t": u((H, 3 * H), sc_rnn),
        "enc_bih": u((1, 3 * H), sc_rnn),
        "enc_bhh": u((1, 3 * H), sc_rnn),
        # decoder GRU
        "dec_wih_t": u((E, 3 * H), sc_rnn),
        "dec_whh_t": u((H, 3 * H), sc_rnn),
        "dec_bih": u((1, 3 * H), sc_rnn),
        "dec_bhh": u((1, 3 * H), sc_rnn),
        # hidden2mean / hidden2logv  (nn.Linear(H, L) -> W^T is (H, L))
        "wm_t": u((H, L), 1.0 / math.sqrt(H)),
        "bm": u((1, L), 1.0 / math.sqrt(H)),
        "wv_t": u((H, L), 1.0 / math.sqrt(H)),
        "bv": u((1, L), 1.0 / math.sqrt(H)),
        # latent2hidden (nn.Linear(L, H))
        "wl_t": u((L, H), 1.0 / math.sqrt(L)),
        "bl": u((1, H), 1.0 / math.sqrt(L)),
        # outputs2vocab (nn.Linear(H, V))
        "w_voc_t": u((H, V), 1.0 / math.sqrt(H)),
        "b_voc": u((1, V), 1.0 / math.sqrt(H)),
    }
    return params


if __name__ == "__main__":
    # small, module-consistent shapes
    V, E, H, L = 50, 16, 32, 8       # vocab, embedding, hidden, latent
    B, S = 2, 8                      # batch, max sequence length
    sos_idx, eos_idx, pad_idx, unk_idx = 1, 2, 0, 3

    key = jax.random.PRNGKey(0)
    k_param, k_tok, k_eps = jax.random.split(key, 3)

    params = make_params(k_param, V, E, H, L)

    # deterministic example inputs (lengths must be >= 1, as PyTorch's
    # pack_padded_sequence rejects zero-length sequences)
    input_sequence = jax.random.randint(k_tok, (B, S), 4, V, dtype=jnp.int32)
    length = jnp.array([5, 8], dtype=jnp.int32)          # max length == S
    assert bool(jnp.all(length >= 1))
    # TODO(synk): the PyTorch forward draws z-noise with torch.randn on device;
    # here the reparameterization noise is drawn deterministically with JAX.
    eps = jax.random.normal(k_eps, (B, L), jnp.float32)

    logp, mean, logv, _, z, _ = sentence_vae_forward(params, input_sequence, length, eps)
    jax.block_until_ready((logp, mean, logv, z))

    assert logp.shape == (B, S, V)
    assert mean.shape == (B, L) and logv.shape == (B, L) and z.shape == (B, L)
    assert bool(jnp.all(jnp.isfinite(logp)))
    assert bool(jnp.all(jnp.isfinite(z)))
    # each log_softmax row sums (in prob space) to 1
    assert bool(jnp.allclose(jnp.sum(jnp.exp(logp), axis=-1), 1.0, atol=1e-3))

    print("KERNEL_OK")
</pallas_src>

<mosaic_0001>
module attributes {stable_mosaic.version = 11 : i64} {
  func.func @encoder_reparam_kernel(%arg0: memref<16x16xf32, #tpu.memory_space<vmem>>, %arg1: memref<2x1xi32, #tpu.memory_space<vmem>>, %arg2: memref<2x8xf32, #tpu.memory_space<vmem>>, %arg3: memref<16x96xf32, #tpu.memory_space<vmem>>, %arg4: memref<32x96xf32, #tpu.memory_space<vmem>>, %arg5: memref<1x96xf32, #tpu.memory_space<vmem>>, %arg6: memref<1x96xf32, #tpu.memory_space<vmem>>, %arg7: memref<32x8xf32, #tpu.memory_space<vmem>>, %arg8: memref<1x8xf32, #tpu.memory_space<vmem>>, %arg9: memref<32x8xf32, #tpu.memory_space<vmem>>, %arg10: memref<1x8xf32, #tpu.memory_space<vmem>>, %arg11: memref<8x32xf32, #tpu.memory_space<vmem>>, %arg12: memref<1x32xf32, #tpu.memory_space<vmem>>, %arg13: memref<2x8xf32, #tpu.memory_space<vmem>>, %arg14: memref<2x8xf32, #tpu.memory_space<vmem>>, %arg15: memref<2x8xf32, #tpu.memory_space<vmem>>, %arg16: memref<2x32xf32, #tpu.memory_space<vmem>>, %arg17: memref<16x96xf32, #tpu.memory_space<vmem>>) attributes {dimension_semantics = [], scalar_prefetch = 0 : i64, scratch_operands = 1 : i64, tpu.core_type = #tpu.core_type<tc>} {
    %c0 = arith.constant 0 : index
    %c0_0 = arith.constant 0 : index
    %0 = vector.load %arg0[%c0, %c0_0] : memref<16x16xf32, #tpu.memory_space<vmem>>, vector<16x16xf32>
    %c0_1 = arith.constant 0 : index
    %c0_2 = arith.constant 0 : index
    %1 = vector.load %arg3[%c0_1, %c0_2] : memref<16x96xf32, #tpu.memory_space<vmem>>, vector<16x96xf32>
    %cst = arith.constant dense<0.000000e+00> : vector<16x96xf32>
    %2 = tpu.matmul %0, %1, %cst {dimension_numbers = #tpu.dot_dimension_numbers<[1], [0], [0], [1], [0, 0, 1, 1], [], []>} : vector<16x16xf32>, vector<16x96xf32>, vector<16x96xf32> -> vector<16x96xf32>
    %c0_3 = arith.constant 0 : index
    %c0_4 = arith.constant 0 : index
    %3 = vector.load %arg5[%c0_3, %c0_4] : memref<1x96xf32, #tpu.memory_space<vmem>>, vector<1x96xf32>
    %4 = vector.broadcast %3 : vector<1x96xf32> to vector<16x96xf32>
    %5 = arith.addf %2, %4 : vector<16x96xf32>
    %c0_5 = arith.constant 0 : index
    %c0_6 = arith.constant 0 : index
    %6 = vector.load %arg17[%c0_5, %c0_6] : memref<16x96xf32, #tpu.memory_space<vmem>>, vector<16x96xf32>
    tpu.vector_store %arg17[%c0_5, %c0_6], %5 {strides = array<i32>} : memref<16x96xf32, #tpu.memory_space<vmem>>, vector<16x96xf32>,
    %c0_7 = arith.constant 0 : index
    %c0_8 = arith.constant 0 : index
    %7 = vector.load %arg1[%c0_7, %c0_8] : memref<2x1xi32, #tpu.memory_space<vmem>>, vector<2x1xi32>
    %c0_9 = arith.constant 0 : index
    %c0_10 = arith.constant 0 : index
    %8 = vector.load %arg4[%c0_9, %c0_10] : memref<32x96xf32, #tpu.memory_space<vmem>>, vector<32x96xf32>
    %c0_11 = arith.constant 0 : index
    %c0_12 = arith.constant 0 : index
    %9 = vector.load %arg6[%c0_11, %c0_12] : memref<1x96xf32, #tpu.memory_space<vmem>>, vector<1x96xf32>
    %cst_13 = arith.constant 0.000000e+00 : f32
    %10 = vector.broadcast %cst_13 : f32 to vector<2x32xf32>
    %c0_i32 = arith.constant 0 : i32
    %c8_i32 = arith.constant 8 : i32
    %11 = arith.addi %c0_i32, %c8_i32 : i32
    %c1_i32 = arith.constant 1 : i32
    %12 = scf.for %arg18 = %c0_i32 to %11 step %c1_i32 iter_args(%arg19 = %10) -> (vector<2x32xf32>)  : i32 {
      %c2_i32 = arith.constant 2 : i32
      %38 = arith.muli %arg18, %c2_i32 : i32
      %39 = tpu.assume_multiple %38, 2 : i32
      %40 = arith.index_cast %39 : i32 to index
      %c0_41 = arith.constant 0 : index
      %41 = vector.load %arg17[%40, %c0_41] : memref<16x96xf32, #tpu.memory_space<vmem>>, vector<2x96xf32>
      %cst_42 = arith.constant dense<0.000000e+00> : vector<2x96xf32>
      %42 = tpu.matmul %arg19, %8, %cst_42 {dimension_numbers = #tpu.dot_dimension_numbers<[1], [0], [0], [1], [0, 0, 1, 1], [], []>} : vector<2x32xf32>, vector<32x96xf32>, vector<2x96xf32> -> vector<2x96xf32>
      %43 = vector.broadcast %9 : vector<1x96xf32> to vector<2x96xf32>
      %44 = arith.addf %42, %43 : vector<2x96xf32>
      %45 = vector.extract_strided_slice %41 {offsets = [0, 0], sizes = [2, 32], strides = [1, 1]} : vector<2x96xf32> to vector<2x32xf32>
      %46 = vector.extract_strided_slice %44 {offsets = [0, 0], sizes = [2, 32], strides = [1, 1]} : vector<2x96xf32> to vector<2x32xf32>
      %47 = arith.addf %45, %46 : vector<2x32xf32>
      %48 = arith.negf %47 : vector<2x32xf32>
      %49 = math.exp %48 : vector<2x32xf32>
      %cst_43 = arith.constant 1.000000e+00 : f32
      %50 = vector.broadcast %cst_43 : f32 to vector<2x32xf32>
      %51 = arith.addf %50, %49 : vector<2x32xf32>
      %52 = arith.divf %50, %51 : vector<2x32xf32>
      %53 = vector.extract_strided_slice %41 {offsets = [0, 32], sizes = [2, 32], strides = [1, 1]} : vector<2x96xf32> to vector<2x32xf32>
      %54 = vector.extract_strided_slice %44 {offsets = [0, 32], sizes = [2, 32], strides = [1, 1]} : vector<2x96xf32> to vector<2x32xf32>
      %55 = arith.addf %53, %54 : vector<2x32xf32>
      %56 = arith.negf %55 : vector<2x32xf32>
      %57 = math.exp %56 : vector<2x32xf32>
      %cst_44 = arith.constant 1.000000e+00 : f32
      %58 = vector.broadcast %cst_44 : f32 to vector<2x32xf32>
      %59 = arith.addf %58, %57 : vector<2x32xf32>
      %60 = arith.divf %58, %59 : vector<2x32xf32>
      %61 = vector.extract_strided_slice %41 {offsets = [0, 64], sizes = [2, 32], strides = [1, 1]} : vector<2x96xf32> to vector<2x32xf32>
      %62 = vector.extract_strided_slice %44 {offsets = [0, 64], sizes = [2, 32], strides = [1, 1]} : vector<2x96xf32> to vector<2x32xf32>
      %63 = arith.mulf %52, %62 : vector<2x32xf32>
      %64 = arith.addf %61, %63 : vector<2x32xf32>
      %65 = math.tanh %64 : vector<2x32xf32>
      %cst_45 = arith.constant 1.000000e+00 : f32
      %66 = vector.broadcast %cst_45 : f32 to vector<2x32xf32>
      %67 = arith.subf %66, %60 : vector<2x32xf32>
      %68 = arith.mulf %67, %65 : vector<2x32xf32>
      %69 = arith.mulf %60, %arg19 : vector<2x32xf32>
      %70 = arith.addf %68, %69 : vector<2x32xf32>
      %71 = vector.broadcast %arg18 : i32 to vector<2x1xi32>
      %72 = arith.cmpi slt, %71, %7 : vector<2x1xi32>
      %73 = vector.shape_cast %72 : vector<2x1xi1> to vector<2x1xi1>
      %74 = vector.broadcast %73 : vector<2x1xi1> to vector<2x32xi1>
      %75 = arith.select %74, %70, %arg19 : vector<2x32xi1>, vector<2x32xf32>
      scf.yield %75 : vector<2x32xf32>
    }
    %c8_i32_14 = arith.constant 8 : i32
    %c0_15 = arith.constant 0 : index
    %c0_16 = arith.constant 0 : index
    %13 = vector.load %arg7[%c0_15, %c0_16] : memref<32x8xf32, #tpu.memory_space<vmem>>, vector<32x8xf32>
    %cst_17 = arith.constant dense<0.000000e+00> : vector<2x8xf32>
    %14 = tpu.matmul %12, %13, %cst_17 {dimension_numbers = #tpu.dot_dimension_numbers<[1], [0], [0], [1], [0, 0, 1, 1], [], []>} : vector<2x32xf32>, vector<32x8xf32>, vector<2x8xf32> -> vector<2x8xf32>
    %c0_18 = arith.constant 0 : index
    %c0_19 = arith.constant 0 : index
    %15 = vector.load %arg8[%c0_18, %c0_19] : memref<1x8xf32, #tpu.memory_space<vmem>>, vector<1x8xf32>
    %16 = vector.broadcast %15 : vector<1x8xf32> to vector<2x8xf32>
    %17 = arith.addf %14, %16 : vector<2x8xf32>
    %c0_20 = arith.constant 0 : index
    %c0_21 = arith.constant 0 : index
    %18 = vector.load %arg9[%c0_20, %c0_21] : memref<32x8xf32, #tpu.memory_space<vmem>>, vector<32x8xf32>
    %cst_22 = arith.constant dense<0.000000e+00> : vector<2x8xf32>
    %19 = tpu.matmul %12, %18, %cst_22 {dimension_numbers = #tpu.dot_dimension_numbers<[1], [0], [0], [1], [0, 0, 1, 1], [], []>} : vector<2x32xf32>, vector<32x8xf32>, vector<2x8xf32> -> vector<2x8xf32>
    %c0_23 = arith.constant 0 : index
    %c0_24 = arith.constant 0 : index
    %20 = vector.load %arg10[%c0_23, %c0_24] : memref<1x8xf32, #tpu.memory_space<vmem>>, vector<1x8xf32>
    %21 = vector.broadcast %20 : vector<1x8xf32> to vector<2x8xf32>
    %22 = arith.addf %19, %21 : vector<2x8xf32>
    %cst_25 = arith.constant 5.000000e-01 : f32
    %23 = vector.broadcast %cst_25 : f32 to vector<2x8xf32>
    %24 = arith.mulf %23, %22 : vector<2x8xf32>
    %25 = math.exp %24 : vector<2x8xf32>
    %c0_26 = arith.constant 0 : index
    %c0_27 = arith.constant 0 : index
    %26 = vector.load %arg2[%c0_26, %c0_27] : memref<2x8xf32, #tpu.memory_space<vmem>>, vector<2x8xf32>
    %27 = arith.mulf %26, %25 : vector<2x8xf32>
    %28 = arith.addf %27, %17 : vector<2x8xf32>
    %c0_28 = arith.constant 0 : index
    %c0_29 = arith.constant 0 : index
    %29 = vector.load %arg11[%c0_28, %c0_29] : memref<8x32xf32, #tpu.memory_space<vmem>>, vector<8x32xf32>
    %cst_30 = arith.constant dense<0.000000e+00> : vector<2x32xf32>
    %30 = tpu.matmul %28, %29, %cst_30 {dimension_numbers = #tpu.dot_dimension_numbers<[1], [0], [0], [1], [0, 0, 1, 1], [], []>} : vector<2x8xf32>, vector<8x32xf32>, vector<2x32xf32> -> vector<2x32xf32>
    %c0_31 = arith.constant 0 : index
    %c0_32 = arith.constant 0 : index
    %31 = vector.load %arg12[%c0_31, %c0_32] : memref<1x32xf32, #tpu.memory_space<vmem>>, vector<1x32xf32>
    %32 = vector.broadcast %31 : vector<1x32xf32> to vector<2x32xf32>
    %33 = arith.addf %30, %32 : vector<2x32xf32>
    %c0_33 = arith.constant 0 : index
    %c0_34 = arith.constant 0 : index
    %34 = vector.load %arg13[%c0_33, %c0_34] : memref<2x8xf32, #tpu.memory_space<vmem>>, vector<2x8xf32>
    tpu.vector_store %arg13[%c0_33, %c0_34], %17 {strides = array<i32>} : memref<2x8xf32, #tpu.memory_space<vmem>>, vector<2x8xf32>,
    %c0_35 = arith.constant 0 : index
    %c0_36 = arith.constant 0 : index
    %35 = vector.load %arg14[%c0_35, %c0_36] : memref<2x8xf32, #tpu.memory_space<vmem>>, vector<2x8xf32>
    tpu.vector_store %arg14[%c0_35, %c0_36], %22 {strides = array<i32>} : memref<2x8xf32, #tpu.memory_space<vmem>>, vector<2x8xf32>,
    %c0_37 = arith.constant 0 : index
    %c0_38 = arith.constant 0 : index
    %36 = vector.load %arg15[%c0_37, %c0_38] : memref<2x8xf32, #tpu.memory_space<vmem>>, vector<2x8xf32>
    tpu.vector_store %arg15[%c0_37, %c0_38], %28 {strides = array<i32>} : memref<2x8xf32, #tpu.memory_space<vmem>>, vector<2x8xf32>,
    %c0_39 = arith.constant 0 : index
    %c0_40 = arith.constant 0 : index
    %37 = vector.load %arg16[%c0_39, %c0_40] : memref<2x32xf32, #tpu.memory_space<vmem>>, vector<2x32xf32>
    tpu.vector_store %arg16[%c0_39, %c0_40], %33 {strides = array<i32>} : memref<2x32xf32, #tpu.memory_space<vmem>>, vector<2x32xf32>,
    return
  }
}

</mosaic_0001>

<llo_original>
// kernel: tpu_custom_call.1
$region0: #{tpu_custom_call.1}
  #allocation0 [shape = 'u32[]', space=smem, size = 0x4, offset = 0x4, fixed_abs, tag = 'smem constant byte address 0x4 - core index']
  #allocation1 [shape = 'u32[144,128]{1,0:T(1,128)}', space=vmem, size = 0x12000, scoped, tag = 'internal scratch']
  #allocation2 [shape = 'f32[16,96]{1,0:T(8,128)}', space=vmem, size = 0x2000, scoped, tag = 'scratch operand']
  %s0 = inlined_call_operand.vmem [shape: f32[16,16], index: 0, kind: input, shape index: {}]
  %s1 = inlined_call_operand.vmem [shape: s32[2,1], index: 1, kind: input, shape index: {}]
  %s2 = inlined_call_operand.vmem [shape: f32[2,8], index: 2, kind: input, shape index: {}]
  %s3 = inlined_call_operand.vmem [shape: f32[16,96], index: 3, kind: input, shape index: {}]
  %s4 = inlined_call_operand.vmem [shape: f32[32,96], index: 4, kind: input, shape index: {}]
  %s5 = inlined_call_operand.vmem [shape: f32[1,96], index: 5, kind: input, shape index: {}]
  %s6 = inlined_call_operand.vmem [shape: f32[1,96], index: 6, kind: input, shape index: {}]
  %s7 = inlined_call_operand.vmem [shape: f32[32,8], index: 7, kind: input, shape index: {}]
  %s8 = inlined_call_operand.vmem [shape: f32[1,8], index: 8, kind: input, shape index: {}]
  %s9 = inlined_call_operand.vmem [shape: f32[32,8], index: 9, kind: input, shape index: {}]
  %s10 = inlined_call_operand.vmem [shape: f32[1,8], index: 10, kind: input, shape index: {}]
  %s11 = inlined_call_operand.vmem [shape: f32[8,32], index: 11, kind: input, shape index: {}]
  %s12 = inlined_call_operand.vmem [shape: f32[1,32], index: 12, kind: input, shape index: {}]
  %s13 = inlined_call_operand.hbm [shape: f32[2,8], index: 13, kind: output, shape index: {0}]
  %s14 = inlined_call_operand.hbm [shape: f32[2,8], index: 14, kind: output, shape index: {1}]
  %s15 = inlined_call_operand.hbm [shape: f32[2,8], index: 15, kind: output, shape index: {2}]
  %s16 = inlined_call_operand.hbm [shape: f32[2,32], index: 16, kind: output, shape index: {3}]
  %17 = xla_tuple %s13, %s14, %s15, %s16
  %s18 = sld [smem:[#allocation0]]
  $region93: #{tpu_custom_call.1} parent=0
    _
  %s20 = ssub.s32 1, %s18
  %s21 = scalar_select 0, %s20, %s18
  $region1: #{tpu_custom_call.1} parent=0
    #allocation3 [shape = 'u8[1024]{0}', space=vmem, size = 0x400, scoped, tag = 'output window, operand 0, single buffered']
    #allocation4 [shape = 's32[1]{0}', space=sflag, size = 0x4, scoped, tag = 'scoped memory for tpu_custom_call.1']
    #allocation5 [shape = 'u8[1024]{0}', space=vmem, size = 0x400, scoped, tag = 'output window, operand 1, single buffered']
    #allocation6 [shape = 's32[1]{0}', space=sflag, size = 0x4, scoped, tag = 'scoped memory for tpu_custom_call.1']
    #allocation7 [shape = 'u8[1024]{0}', space=vmem, size = 0x400, scoped, tag = 'output window, operand 2, single buffered']
    #allocation8 [shape = 'u8[1024]{0}', space=vmem, size = 0x400, scoped, tag = 'output window, operand 3, single buffered']
    #allocation9 [shape = 's32[1]{0}', space=sflag, size = 0x4, scoped, tag = 'scoped memory for tpu_custom_call.1']
    %22 = vsyncpa [#allocation4], 0
    %23 = vsyncpa [#allocation6], 0
    %24 = vsyncpa [#allocation9], 0
    // Predicated region
    $region2: #{tpu_custom_call.1} parent=1 // pred_check
      _
    $region3: #{tpu_custom_call.1} parent=1 // pred_check_branch
      %26 = sbr.rel (0) target = $region5
    $region4: #{tpu_custom_call.1} parent=1 // pred_region
      _
    $region5: #{tpu_custom_call.1} parent=1 // pred_fallthru
      _
    // Predicated region
    $region6: #{tpu_custom_call.1} parent=1 // pred_check
      _
    $region7: #{tpu_custom_call.1} parent=1 // pred_check_branch
      %28 = sbr.rel (0) target = $region9
    $region8: #{tpu_custom_call.1} parent=1 // pred_region
      _
    $region9: #{tpu_custom_call.1} parent=1 // pred_fallthru
      _
    // Predicated region
    $region10: #{tpu_custom_call.1} parent=1 // pred_check
      _
    $region11: #{tpu_custom_call.1} parent=1 // pred_check_branch
      %30 = sbr.rel (0) target = $region13
    $region12: #{tpu_custom_call.1} parent=1 // pred_region
      _
    $region13: #{tpu_custom_call.1} parent=1 // pred_fallthru
      _
    // Predicated region
    $region14: #{tpu_custom_call.1} parent=1 // pred_check
      _
    $region15: #{tpu_custom_call.1} parent=1 // pred_check_branch
      %32 = sbr.rel (0) target = $region17
    $region16: #{tpu_custom_call.1} parent=1 // pred_region
      _
    $region17: #{tpu_custom_call.1} parent=1 // pred_fallthru
      _
    // Predicated region
    $region18: #{tpu_custom_call.1} parent=1 // pred_check
      _
    $region19: #{tpu_custom_call.1} parent=1 // pred_check_branch
      %34 = sbr.rel (0) target = $region21
    $region20: #{tpu_custom_call.1} parent=1 // pred_region
      _
    $region21: #{tpu_custom_call.1} parent=1 // pred_fallthru
      _
    // Predicated region
    $region22: #{tpu_custom_call.1} parent=1 // pred_check
      _
    $region23: #{tpu_custom_call.1} parent=1 // pred_check_branch
      %36 = sbr.rel (0) target = $region25
    $region24: #{tpu_custom_call.1} parent=1 // pred_region
      _
    $region25: #{tpu_custom_call.1} parent=1 // pred_fallthru
      _
    // Predicated region
    $region26: #{tpu_custom_call.1} parent=1 // pred_check
      _
    $region27: #{tpu_custom_call.1} parent=1 // pred_check_branch
      %38 = sbr.rel (0) target = $region29
    $region28: #{tpu_custom_call.1} parent=1 // pred_region
      _
    $region29: #{tpu_custom_call.1} parent=1 // pred_fallthru
      _
    // Predicated region
    $region30: #{tpu_custom_call.1} parent=1 // pred_check
      _
    $region31: #{tpu_custom_call.1} parent=1 // pred_check_branch
      %40 = sbr.rel (0) target = $region33
    $region32: #{tpu_custom_call.1} parent=1 // pred_region
      _
    $region33: #{tpu_custom_call.1} parent=1 // pred_fallthru
      _
    // Predicated region
    $region34: #{tpu_custom_call.1} parent=1 // pred_check
      _
    $region35: #{tpu_custom_call.1} parent=1 // pred_check_branch
      %42 = sbr.rel (0) target = $region37
    $region36: #{tpu_custom_call.1} parent=1 // pred_region
      _
    $region37: #{tpu_custom_call.1} parent=1 // pred_fallthru
      _
    // Predicated region
    $region38: #{tpu_custom_call.1} parent=1 // pred_check
      _
    $region39: #{tpu_custom_call.1} parent=1 // pred_check_branch
      %44 = sbr.rel (0) target = $region41
    $region40: #{tpu_custom_call.1} parent=1 // pred_region
      _
    $region41: #{tpu_custom_call.1} parent=1 // pred_fallthru
      _
    // Predicated region
    $region42: #{tpu_custom_call.1} parent=1 // pred_check
      _
    $region43: #{tpu_custom_call.1} parent=1 // pred_check_branch
      %46 = sbr.rel (0) target = $region45
    $region44: #{tpu_custom_call.1} parent=1 // pred_region
      _
    $region45: #{tpu_custom_call.1} parent=1 // pred_fallthru
      _
    // Predicated region
    $region46: #{tpu_custom_call.1} parent=1 // pred_check
      _
    $region47: #{tpu_custom_call.1} parent=1 // pred_check_branch
      %48 = sbr.rel (0) target = $region49
    $region48: #{tpu_custom_call.1} parent=1 // pred_region
      _
    $region49: #{tpu_custom_call.1} parent=1 // pred_fallthru
      _
    // Predicated region
    $region50: #{tpu_custom_call.1} parent=1 // pred_check
      _
    $region51: #{tpu_custom_call.1} parent=1 // pred_check_branch
      %50 = sbr.rel (0) target = $region53
    $region52: #{tpu_custom_call.1} parent=1 // pred_region
      _
    $region53: #{tpu_custom_call.1} parent=1 // pred_fallthru
      _
    %v51 = vld [vmem:[%s0] sm:$0xff]
    %v52 = vld [vmem:[%s0 + $0x8] sm:$0xff]
    %v53 = vld [vmem:[%s3] sm:$0xff]
    %v54 = vld [vmem:[%s3 + $0x8] sm:$0xff]
    %v55 = vld [vmem:[%s5] sm:$0x1]
    %v57 = vlaneseq
    %v58 = vshrl.u32 %v57, 7
    %v59 = vsub.s32 0, %v58
    %v60 = vrot.slane %v55, %v59
    %vm62 = vcmask 130048
    %v64 = vsel %vm62, %v51, 0
    %v67 = vsel %vm62, %v52, 0
    %69 = vmatprep.subr.mxu0 0.0
    %70 = vmatpush1.msra.mxu0 %v53
    %71 = vmatprep.subr.mxu0 0.0
    %72 = vmatpush1.msra.mxu0 %v54
    %73 = vmatprep.subr.mxu0 0.0
    %74 = vmatpush1.msra.mxu0 0.0
    %75 = vmatprep.subr.mxu0 0.0
    %76 = vmatpush1.msra.mxu0 0.0
    %77 = vmatprep.subr.mxu0 0.0
    %78 = vmatpush1.msra.mxu0 0.0
    %79 = vmatprep.subr.mxu0 0.0
    %80 = vmatpush1.msra.mxu0 0.0
    %81 = vmatprep.subr.mxu0 0.0
    %82 = vmatpush1.msra.mxu0 0.0
    %83 = vmatprep.subr.mxu0 0.0
    %84 = vmatpush1.msra.mxu0 0.0
    %85 = vmatprep.subr.mxu0 0.0
    %86 = vmatpush1.msra.mxu0 0.0
    %87 = vmatprep.subr.mxu0 0.0
    %88 = vmatpush1.msra.mxu0 0.0
    %89 = vmatprep.subr.mxu0 0.0
    %90 = vmatpush1.msra.mxu0 0.0
    %91 = vmatprep.subr.mxu0 0.0
    %92 = vmatpush1.msra.mxu0 0.0
    %93 = vmatprep.subr.mxu0 0.0
    %94 = vmatpush1.msra.mxu0 0.0
    %95 = vmatprep.subr.mxu0 0.0
    %96 = vmatpush1.msra.mxu0 0.0
    %97 = vmatprep.subr.mxu0 0.0
    %98 = vmatpush1.msra.mxu0 0.0
    %99 = vmatprep.subr.mxu0 0.0
    %100 = vmatpush1.msra.mxu0 0.0
    %101 = vmatprep.subr.mxu0 0.0
    %102 = vmatpush1.msra.mxu0 0.0
    %103 = vmatprep.subr.mxu0 0.0
    %104 = vmatpush1.msra.mxu0 0.0
    %105 = vmatprep.subr.mxu0 0.0
    %106 = vmatpush1.msra.mxu0 0.0
    %107 = vmatprep.subr.mxu0 0.0
    %108 = vmatpush1.msra.mxu0 0.0
    %109 = vmatprep.subr.mxu0 0.0
    %110 = vmatpush1.msra.mxu0 0.0
    %111 = vmatprep.subr.mxu0 0.0
    %112 = vmatpush1.msra.mxu0 0.0
    %113 = vmatprep.subr.mxu0 0.0
    %114 = vmatpush1.msra.mxu0 0.0
    %115 = vmatprep.subr.mxu0 0.0
    %116 = vmatpush1.msra.mxu0 0.0
    %117 = vmatprep.subr.mxu0 0.0
    %118 = vmatpush1.msra.mxu0 0.0
    %119 = vmatprep.subr.mxu0 0.0
    %120 = vmatpush1.msra.mxu0 0.0
    %121 = vmatprep.subr.mxu0 0.0
    %122 = vmatpush1.msra.mxu0 0.0
    %123 = vmatprep.subr.mxu0 0.0
    %124 = vmatpush1.msra.mxu0 0.0
    %125 = vmatprep.subr.mxu0 0.0
    %126 = vmatpush1.msra.mxu0 0.0
    %127 = vmatprep.subr.mxu0 0.0
    %128 = vmatpush1.msra.mxu0 0.0
    %129 = vmatprep.subr.mxu0 0.0
    %130 = vmatpush1.msra.mxu0 0.0
    %131 = vmatprep.subr.mxu0 0.0
    %132 = vmatpush1.msra.mxu0 0.0
    %133 = vmatprep.mubr.f32.mxu0 0.0
    %134 = vmatmul.mubr.f32.gmra.mrb[0].mxu0 %v64
    %v135 = vpop.f32.mrb[0].mxu0
    %v136 = vadd.f32 %v60, %v135
    %v137 = vpop.f32.mrb[0].mxu0
    %138 = vmatprep.mubr.f32.mxu0 0.0
    %139 = vmatmul.mubr.f32.gmra.mrb[0].mxu0 %v67
    %v140 = vpop.f32.mrb[0].mxu0
    %v141 = vadd.f32 %v60, %v140
    %v142 = vpop.f32.mrb[0].mxu0
    %143 = vdwg.mxu0
    %vm144 = vcmask 785408
    %145 = vst.msk [vmem:[#allocation2] sm:$0xff] %vm144, %v136
    %146 = vst.msk [vmem:[#allocation2 + $0x8] sm:$0xff] %vm144, %v141
    %v147 = vld [vmem:[%s1] sm:$0x3]
    %v148 = vld [vmem:[%s4] sm:$0xff]
    %v149 = vld [vmem:[%s4 + $0x8] sm:$0xff]
    %v150 = vld [vmem:[%s4 + $0x10] sm:$0xff]
    %v151 = vld [vmem:[%s4 + $0x18] sm:$0xff]
    %v152 = vld [vmem:[%s6] sm:$0x1]
    loop: start=0, step=1, limit=8
    $region54: #{tpu_custom_call.1} parent=1 // loop_pre_header
      _
    $region55: #{tpu_custom_call.1} parent=1 // loop_header
      %s154 = sphi 0, %s158
      %p155 = scmp.ge.s32.totalorder %s154, 8
      %v159 = vphi 0.0, %v278
    $region56: #{tpu_custom_call.1} parent=1 // loop_header_branch
      %157 = sbr.rel (%p155) target = $region60
    $region57: #{tpu_custom_call.1} parent=1 // loop_body
      %s160 = smul.u32 %s154, 2
      %s161 = scalar_lea.vmem [#allocation2], %s160
      %v162 = vld [vmem:[%s161] sm:$0x3]
      %v164 = vlaneseq
      %v165 = vshrl.u32 %v164, 7
      %v166 = vsub.s32 0, %v165
      %v167 = vrot.slane %v152, %v166
      %170 = vrot.lane.b32.xlu0 %v159, 96
      %v171 = vpop.permute.xlu0 %170
      %vm172 = vcmask 261120
      %v173 = vsel %vm172, %v171, 0
      %175 = vmatprep.subr.mxu0 0.0
      %176 = vmatpush1.msra.mxu0 %v148
      %177 = vmatprep.subr.mxu0 0.0
      %178 = vmatpush1.msra.mxu0 %v149
      %179 = vmatprep.subr.mxu0 0.0
      %180 = vmatpush1.msra.mxu0 %v150
      %181 = vmatprep.subr.mxu0 0.0
      %182 = vmatpush1.msra.mxu0 %v151
      %183 = vmatprep.subr.mxu0 0.0
      %184 = vmatpush1.msra.mxu0 0.0
      %185 = vmatprep.subr.mxu0 0.0
      %186 = vmatpush1.msra.mxu0 0.0
      %187 = vmatprep.subr.mxu0 0.0
      %188 = vmatpush1.msra.mxu0 0.0
      %189 = vmatprep.subr.mxu0 0.0
      %190 = vmatpush1.msra.mxu0 0.0
      %191 = vmatprep.subr.mxu0 0.0
      %192 = vmatpush1.msra.mxu0 0.0
      %193 = vmatprep.subr.mxu0 0.0
      %194 = vmatpush1.msra.mxu0 0.0
      %195 = vmatprep.subr.mxu0 0.0
      %196 = vmatpush1.msra.mxu0 0.0
      %197 = vmatprep.subr.mxu0 0.0
      %198 = vmatpush1.msra.mxu0 0.0
      %199 = vmatprep.subr.mxu0 0.0
      %200 = vmatpush1.msra.mxu0 0.0
      %201 = vmatprep.subr.mxu0 0.0
      %202 = vmatpush1.msra.mxu0 0.0
      %203 = vmatprep.subr.mxu0 0.0
      %204 = vmatpush1.msra.mxu0 0.0
      %205 = vmatprep.subr.mxu0 0.0
      %206 = vmatpush1.msra.mxu0 0.0
      %207 = vmatprep.subr.mxu0 0.0
      %208 = vmatpush1.msra.mxu0 0.0
      %209 = vmatprep.subr.mxu0 0.0
      %210 = vmatpush1.msra.mxu0 0.0
      %211 = vmatprep.subr.mxu0 0.0
      %212 = vmatpush1.msra.mxu0 0.0
      %213 = vmatprep.subr.mxu0 0.0
      %214 = vmatpush1.msra.mxu0 0.0
      %215 = vmatprep.subr.mxu0 0.0
      %216 = vmatpush1.msra.mxu0 0.0
      %217 = vmatprep.subr.mxu0 0.0
      %218 = vmatpush1.msra.mxu0 0.0
      %219 = vmatprep.subr.mxu0 0.0
      %220 = vmatpush1.msra.mxu0 0.0
      %221 = vmatprep.subr.mxu0 0.0
      %222 = vmatpush1.msra.mxu0 0.0
      %223 = vmatprep.subr.mxu0 0.0
      %224 = vmatpush1.msra.mxu0 0.0
      %225 = vmatprep.subr.mxu0 0.0
      %226 = vmatpush1.msra.mxu0 0.0
      %227 = vmatprep.subr.mxu0 0.0
      %228 = vmatpush1.msra.mxu0 0.0
      %229 = vmatprep.subr.mxu0 0.0
      %230 = vmatpush1.msra.mxu0 0.0
      %231 = vmatprep.subr.mxu0 0.0
      %232 = vmatpush1.msra.mxu0 0.0
      %233 = vmatprep.subr.mxu0 0.0
      %234 = vmatpush1.msra.mxu0 0.0
      %235 = vmatprep.subr.mxu0 0.0
      %236 = vmatpush1.msra.mxu0 0.0
      %237 = vmatprep.subr.mxu0 0.0
      %238 = vmatpush1.msra.mxu0 0.0
      %239 = vmatprep.mubr.f32.mxu0 0.0
      %240 = vmatmul.mubr.f32.gmra.mrb[0].mxu0 %v173
      %v241 = vpop.f32.mrb[0].mxu0
      %v242 = vadd.f32 %v167, %v241
      %v243 = vpop.f32.mrb[0].mxu0
      %244 = vdwg.mxu0
      %v245 = vadd.f32 %v162, %v242
      %v246 = vxor.u32 %v245, 2147483648
      %v247 = vmul.f32 %v246, 1.442695
      %v248 = vpow.pop %v247
      %v249 = vadd.f32 %v248, 1.0
      %v250 = vrcp.pop %v249
      %v251 = vmul.f32 1.0, %v250
      %253 = vrot.lane.b32.xlu0 %v242, 64
      %v254 = vpop.permute.xlu0 %253
      %v256 = vmul.f32 %v251, %v254
      %258 = vrot.lane.b32.xlu0 %v256, 64
      %v259 = vpop.permute.xlu0 %258
      %v261 = vadd.f32 %v162, %v259
      %v262 = vtanh.pop %v261
      %v263 = vsub.f32 1.0, %v251
      %265 = vrot.lane.b32.xlu0 %v262, 96
      %v266 = vpop.permute.xlu0 %265
      %v268 = vmul.f32 %v263, %v266
      %v269 = vmul.f32 %v251, %v159
      %v270 = vadd.f32 %v268, %v269
      %v271 = vstv %s154
      %vm272 = vcmp.lt.s32.totalorder %v271, %v147
      %v273 = vsel %vm272, 1, 0
      %274 = vset.pattern.permute.xlu0 0
      %275 = vperm.xlu0 %274, %v273
      %v276 = vpop.permute.xlu0 %275
      %vm277 = vcmp.eq.s32.totalorder %v276, 1
      %v278 = vsel %vm277, %v270, %v159
    $region58: #{tpu_custom_call.1} parent=1 // loop_footer
      %s158 = sadd.s32 1, %s154
    $region59: #{tpu_custom_call.1} parent=1 // loop_footer_branch
      %153 = sbr.rel target = $region55
    $region60: #{tpu_custom_call.1} parent=1 // loop_exit
      _
    %v279 = vld [vmem:[%s7] sm:$0xff]
    %v280 = vld [vmem:[%s7 + $0x8] sm:$0xff]
    %v281 = vld [vmem:[%s7 + $0x10] sm:$0xff]
    %v282 = vld [vmem:[%s7 + $0x18] sm:$0xff]
    %v283 = vld [vmem:[%s8] sm:$0x1]
    %v285 = vlaneseq
    %v286 = vshrl.u32 %v285, 7
    %v287 = vsub.s32 0, %v286
    %v288 = vrot.slane %v283, %v287
    %291 = vrot.lane.b32.xlu0 %v159, 96
    %v292 = vpop.permute.xlu0 %291
    %vm293 = vcmask 261120
    %v294 = vsel %vm293, %v292, 0
    %296 = vmatprep.subr.mxu0 0.0
    %297 = vmatpush1.msra.mxu0 %v279
    %298 = vmatprep.subr.mxu0 0.0
    %299 = vmatpush1.msra.mxu0 %v280
    %300 = vmatprep.subr.mxu0 0.0
    %301 = vmatpush1.msra.mxu0 %v281
    %302 = vmatprep.subr.mxu0 0.0
    %303 = vmatpush1.msra.mxu0 %v282
    %304 = vmatprep.subr.mxu0 0.0
    %305 = vmatpush1.msra.mxu0 0.0
    %306 = vmatprep.subr.mxu0 0.0
    %307 = vmatpush1.msra.mxu0 0.0
    %308 = vmatprep.subr.mxu0 0.0
    %309 = vmatpush1.msra.mxu0 0.0
    %310 = vmatprep.subr.mxu0 0.0
    %311 = vmatpush1.msra.mxu0 0.0
    %312 = vmatprep.subr.mxu0 0.0
    %313 = vmatpush1.msra.mxu0 0.0
    %314 = vmatprep.subr.mxu0 0.0
    %315 = vmatpush1.msra.mxu0 0.0
    %316 = vmatprep.subr.mxu0 0.0
    %317 = vmatpush1.msra.mxu0 0.0
    %318 = vmatprep.subr.mxu0 0.0
    %319 = vmatpush1.msra.mxu0 0.0
    %320 = vmatprep.subr.mxu0 0.0
    %321 = vmatpush1.msra.mxu0 0.0
    %322 = vmatprep.subr.mxu0 0.0
    %323 = vmatpush1.msra.mxu0 0.0
    %324 = vmatprep.subr.mxu0 0.0
    %325 = vmatpush1.msra.mxu0 0.0
    %326 = vmatprep.subr.mxu0 0.0
    %327 = vmatpush1.msra.mxu0 0.0
    %328 = vmatprep.subr.mxu0 0.0
    %329 = vmatpush1.msra.mxu0 0.0
    %330 = vmatprep.subr.mxu0 0.0
    %331 = vmatpush1.msra.mxu0 0.0
    %332 = vmatprep.subr.mxu0 0.0
    %333 = vmatpush1.msra.mxu0 0.0
    %334 = vmatprep.subr.mxu0 0.0
    %335 = vmatpush1.msra.mxu0 0.0
    %336 = vmatprep.subr.mxu0 0.0
    %337 = vmatpush1.msra.mxu0 0.0
    %338 = vmatprep.subr.mxu0 0.0
    %339 = vmatpush1.msra.mxu0 0.0
    %340 = vmatprep.subr.mxu0 0.0
    %341 = vmatpush1.msra.mxu0 0.0
    %342 = vmatprep.subr.mxu0 0.0
    %343 = vmatpush1.msra.mxu0 0.0
    %344 = vmatprep.subr.mxu0 0.0
    %345 = vmatpush1.msra.mxu0 0.0
    %346 = vmatprep.subr.mxu0 0.0
    %347 = vmatpush1.msra.mxu0 0.0
    %348 = vmatprep.subr.mxu0 0.0
    %349 = vmatpush1.msra.mxu0 0.0
    %350 = vmatprep.subr.mxu0 0.0
    %351 = vmatpush1.msra.mxu0 0.0
    %352 = vmatprep.subr.mxu0 0.0
    %353 = vmatpush1.msra.mxu0 0.0
    %354 = vmatprep.subr.mxu0 0.0
    %355 = vmatpush1.msra.mxu0 0.0
    %356 = vmatprep.subr.mxu0 0.0
    %357 = vmatpush1.msra.mxu0 0.0
    %358 = vmatprep.subr.mxu0 0.0
    %359 = vmatpush1.msra.mxu0 0.0
    %360 = vmatprep.mubr.f32.mxu0 0.0
    %361 = vmatmul.mubr.f32.gmra.mrb[0].mxu0 %v294
    %v362 = vpop.f32.mrb[0].mxu0
    %v363 = vadd.f32 %v288, %v362
    %v364 = vpop.f32.mrb[0].mxu0
    %365 = vdwg.mxu0
    %v366 = vld [vmem:[%s9] sm:$0xff]
    %v367 = vld [vmem:[%s9 + $0x8] sm:$0xff]
    %v368 = vld [vmem:[%s9 + $0x10] sm:$0xff]
    %v369 = vld [vmem:[%s9 + $0x18] sm:$0xff]
    %v370 = vld [vmem:[%s10] sm:$0x1]
    %v372 = vlaneseq
    %v373 = vshrl.u32 %v372, 7
    %v374 = vsub.s32 0, %v373
    %v375 = vrot.slane %v370, %v374
    %377 = vmatprep.subr.mxu0 0.0
    %378 = vmatpush1.msra.mxu0 %v366
    %379 = vmatprep.subr.mxu0 0.0
    %380 = vmatpush1.msra.mxu0 %v367
    %381 = vmatprep.subr.mxu0 0.0
    %382 = vmatpush1.msra.mxu0 %v368
    %383 = vmatprep.subr.mxu0 0.0
    %384 = vmatpush1.msra.mxu0 %v369
    %385 = vmatprep.subr.mxu0 0.0
    %386 = vmatpush1.msra.mxu0 0.0
    %387 = vmatprep.subr.mxu0 0.0
    %388 = vmatpush1.msra.mxu0 0.0
    %389 = vmatprep.subr.mxu0 0.0
    %390 = vmatpush1.msra.mxu0 0.0
    %391 = vmatprep.subr.mxu0 0.0
    %392 = vmatpush1.msra.mxu0 0.0
    %393 = vmatprep.subr.mxu0 0.0
    %394 = vmatpush1.msra.mxu0 0.0
    %395 = vmatprep.subr.mxu0 0.0
    %396 = vmatpush1.msra.mxu0 0.0
    %397 = vmatprep.subr.mxu0 0.0
    %398 = vmatpush1.msra.mxu0 0.0
    %399 = vmatprep.subr.mxu0 0.0
    %400 = vmatpush1.msra.mxu0 0.0
    %401 = vmatprep.subr.mxu0 0.0
    %402 = vmatpush1.msra.mxu0 0.0
    %403 = vmatprep.subr.mxu0 0.0
    %404 = vmatpush1.msra.mxu0 0.0
    %405 = vmatprep.subr.mxu0 0.0
    %406 = vmatpush1.msra.mxu0 0.0
    %407 = vmatprep.subr.mxu0 0.0
    %408 = vmatpush1.msra.mxu0 0.0
    %409 = vmatprep.subr.mxu0 0.0
    %410 = vmatpush1.msra.mxu0 0.0
    %411 = vmatprep.subr.mxu0 0.0
    %412 = vmatpush1.msra.mxu0 0.0
    %413 = vmatprep.subr.mxu0 0.0
    %414 = vmatpush1.msra.mxu0 0.0
    %415 = vmatprep.subr.mxu0 0.0
    %416 = vmatpush1.msra.mxu0 0.0
    %417 = vmatprep.subr.mxu0 0.0
    %418 = vmatpush1.msra.mxu0 0.0
    %419 = vmatprep.subr.mxu0 0.0
    %420 = vmatpush1.msra.mxu0 0.0
    %421 = vmatprep.subr.mxu0 0.0
    %422 = vmatpush1.msra.mxu0 0.0
    %423 = vmatprep.subr.mxu0 0.0
    %424 = vmatpush1.msra.mxu0 0.0
    %425 = vmatprep.subr.mxu0 0.0
    %426 = vmatpush1.msra.mxu0 0.0
    %427 = vmatprep.subr.mxu0 0.0
    %428 = vmatpush1.msra.mxu0 0.0
    %429 = vmatprep.subr.mxu0 0.0
    %430 = vmatpush1.msra.mxu0 0.0
    %431 = vmatprep.subr.mxu0 0.0
    %432 = vmatpush1.msra.mxu0 0.0
    %433 = vmatprep.subr.mxu0 0.0
    %434 = vmatpush1.msra.mxu0 0.0
    %435 = vmatprep.subr.mxu0 0.0
    %436 = vmatpush1.msra.mxu0 0.0
    %437 = vmatprep.subr.mxu0 0.0
    %438 = vmatpush1.msra.mxu0 0.0
    %439 = vmatprep.subr.mxu0 0.0
    %440 = vmatpush1.msra.mxu0 0.0
    %441 = vmatprep.mubr.f32.mxu0 0.0
    %442 = vmatmul.mubr.f32.gmra.mrb[0].mxu0 %v294
    %v443 = vpop.f32.mrb[0].mxu0
    %v444 = vadd.f32 %v375, %v443
    %v445 = vpop.f32.mrb[0].mxu0
    %446 = vdwg.mxu0
    %v447 = vmul.f32 %v444, 0.5
    %v448 = vmul.f32 %v447, 1.442695
    %v449 = vpow.pop %v448
    %v450 = vld [vmem:[%s2] sm:$0x3]
    %v451 = vmul.f32 %v450, %v449
    %v452 = vadd.f32 %v451, %v363
    %v453 = vld [vmem:[%s11] sm:$0xff]
    %v454 = vld [vmem:[%s12] sm:$0x1]
    %v456 = vlaneseq
    %v457 = vshrl.u32 %v456, 7
    %v458 = vsub.s32 0, %v457
    %v459 = vrot.slane %v454, %v458
    %vm461 = vcmask 64512
    %v463 = vsel %vm461, %v452, 0
    %465 = vmatprep.subr.mxu0 0.0
    %466 = vmatpush1.msra.mxu0 %v453
    %467 = vmatprep.subr.mxu0 0.0
    %468 = vmatpush1.msra.mxu0 0.0
    %469 = vmatprep.subr.mxu0 0.0
    %470 = vmatpush1.msra.mxu0 0.0
    %471 = vmatprep.subr.mxu0 0.0
    %472 = vmatpush1.msra.mxu0 0.0
    %473 = vmatprep.subr.mxu0 0.0
    %474 = vmatpush1.msra.mxu0 0.0
    %475 = vmatprep.subr.mxu0 0.0
    %476 = vmatpush1.msra.mxu0 0.0
    %477 = vmatprep.subr.mxu0 0.0
    %478 = vmatpush1.msra.mxu0 0.0
    %479 = vmatprep.subr.mxu0 0.0
    %480 = vmatpush1.msra.mxu0 0.0
    %481 = vmatprep.subr.mxu0 0.0
    %482 = vmatpush1.msra.mxu0 0.0
    %483 = vmatprep.subr.mxu0 0.0
    %484 = vmatpush1.msra.mxu0 0.0
    %485 = vmatprep.subr.mxu0 0.0
    %486 = vmatpush1.msra.mxu0 0.0
    %487 = vmatprep.subr.mxu0 0.0
    %488 = vmatpush1.msra.mxu0 0.0
    %489 = vmatprep.subr.mxu0 0.0
    %490 = vmatpush1.msra.mxu0 0.0
    %491 = vmatprep.subr.mxu0 0.0
    %492 = vmatpush1.msra.mxu0 0.0
    %493 = vmatprep.subr.mxu0 0.0
    %494 = vmatpush1.msra.mxu0 0.0
    %495 = vmatprep.subr.mxu0 0.0
    %496 = vmatpush1.msra.mxu0 0.0
    %497 = vmatprep.subr.mxu0 0.0
    %498 = vmatpush1.msra.mxu0 0.0
    %499 = vmatprep.subr.mxu0 0.0
    %500 = vmatpush1.msra.mxu0 0.0
    %501 = vmatprep.subr.mxu0 0.0
    %502 = vmatpush1.msra.mxu0 0.0
    %503 = vmatprep.subr.mxu0 0.0
    %504 = vmatpush1.msra.mxu0 0.0
    %505 = vmatprep.subr.mxu0 0.0
    %506 = vmatpush1.msra.mxu0 0.0
    %507 = vmatprep.subr.mxu0 0.0
    %508 = vmatpush1.msra.mxu0 0.0
    %509 = vmatprep.subr.mxu0 0.0
    %510 = vmatpush1.msra.mxu0 0.0
    %511 = vmatprep.subr.mxu0 0.0
    %512 = vmatpush1.msra.mxu0 0.0
    %513 = vmatprep.subr.mxu0 0.0
    %514 = vmatpush1.msra.mxu0 0.0
    %515 = vmatprep.subr.mxu0 0.0
    %516 = vmatpush1.msra.mxu0 0.0
    %517 = vmatprep.subr.mxu0 0.0
    %518 = vmatpush1.msra.mxu0 0.0
    %519 = vmatprep.subr.mxu0 0.0
    %520 = vmatpush1.msra.mxu0 0.0
    %521 = vmatprep.subr.mxu0 0.0
    %522 = vmatpush1.msra.mxu0 0.0
    %523 = vmatprep.subr.mxu0 0.0
    %524 = vmatpush1.msra.mxu0 0.0
    %525 = vmatprep.subr.mxu0 0.0
    %526 = vmatpush1.msra.mxu0 0.0
    %527 = vmatprep.subr.mxu0 0.0
    %528 = vmatpush1.msra.mxu0 0.0
    %529 = vmatprep.mubr.f32.mxu0 0.0
    %530 = vmatmul.mubr.f32.gmra.mrb[0].mxu0 %v463
    %v531 = vpop.f32.mrb[0].mxu0
    %v532 = vadd.f32 %v459, %v531
    %v533 = vpop.f32.mrb[0].mxu0
    %534 = vdwg.mxu0
    %vm535 = vcmask 58368
    %536 = vst.msk [vmem:[#allocation3] sm:$0x3] %vm535, %v363
    %537 = vst.msk [vmem:[#allocation5] sm:$0x3] %vm535, %v444
    %538 = vst.msk [vmem:[#allocation7] sm:$0x3] %vm535, %v452
    %vm539 = vcmask 254976
    %540 = vst.msk [vmem:[#allocation8] sm:$0x3] %vm539, %v532
    // Predicated region
    $region61: #{tpu_custom_call.1} parent=1 // pred_check
      _
    $region62: #{tpu_custom_call.1} parent=1 // pred_check_branch
      %542 = sbr.rel (0) target = $region64
    $region63: #{tpu_custom_call.1} parent=1 // pred_region
      %s544 = ssub.s32 32, 32
      %545 = vsyncadd [#allocation4], %s544
      %s547 = sshll.u32 [#allocation3], 4
      %s548 = int_to_ptr.vmem [resolvable:$true] %s547
      %550 = dma.vmem_to_hbm [thread:$0]  %s548, 32, %s13, [#allocation4]
    $region64: #{tpu_custom_call.1} parent=1 // pred_fallthru
      _
    // Predicated region
    $region65: #{tpu_custom_call.1} parent=1 // pred_check
      _
    $region66: #{tpu_custom_call.1} parent=1 // pred_check_branch
      %552 = sbr.rel (0) target = $region68
    $region67: #{tpu_custom_call.1} parent=1 // pred_region
      %s554 = ssub.s32 32, 32
      %555 = vsyncadd [#allocation6], %s554
      %s557 = sshll.u32 [#allocation5], 4
      %s558 = int_to_ptr.vmem [resolvable:$true] %s557
      %560 = dma.vmem_to_hbm [thread:$0]  %s558, 32, %s14, [#allocation6]
    $region68: #{tpu_custom_call.1} parent=1 // pred_fallthru
      _
    // Predicated region
    $region69: #{tpu_custom_call.1} parent=1 // pred_check
      _
    $region70: #{tpu_custom_call.1} parent=1 // pred_check_branch
      %562 = sbr.rel (0) target = $region72
    $region71: #{tpu_custom_call.1} parent=1 // pred_region
      %s564 = ssub.s32 32, 32
      %565 = vsyncadd [#allocation6], %s564
      %s567 = sshll.u32 [#allocation7], 4
      %s568 = int_to_ptr.vmem [resolvable:$true] %s567
      %570 = dma.vmem_to_hbm [thread:$0]  %s568, 32, %s15, [#allocation6]
    $region72: #{tpu_custom_call.1} parent=1 // pred_fallthru
      _
    // Predicated region
    $region73: #{tpu_custom_call.1} parent=1 // pred_check
      _
    $region74: #{tpu_custom_call.1} parent=1 // pred_check_branch
      %572 = sbr.rel (0) target = $region76
    $region75: #{tpu_custom_call.1} parent=1 // pred_region
      %s574 = ssub.s32 32, 32
      %575 = vsyncadd [#allocation9], %s574
      %s577 = sshll.u32 [#allocation8], 4
      %s578 = int_to_ptr.vmem [resolvable:$true] %s577
      %580 = dma.vmem_to_hbm [thread:$0]  %s578, 32, %s16, [#allocation9]
    $region76: #{tpu_custom_call.1} parent=1 // pred_fallthru
      _
    // Predicated region
    $region77: #{tpu_custom_call.1} parent=1 // pred_check
      _
    $region78: #{tpu_custom_call.1} parent=1 // pred_check_branch
      %582 = sbr.rel (0) target = $region80
    $region79: #{tpu_custom_call.1} parent=1 // pred_region
      %583 = dma.done [#allocation4], 32
    $region80: #{tpu_custom_call.1} parent=1 // pred_fallthru
      _
    // Predicated region
    $region81: #{tpu_custom_call.1} parent=1 // pred_check
      _
    $region82: #{tpu_custom_call.1} parent=1 // pred_check_branch
      %585 = sbr.rel (0) target = $region84
    $region83: #{tpu_custom_call.1} parent=1 // pred_region
      %586 = dma.done [#allocation6], 32
    $region84: #{tpu_custom_call.1} parent=1 // pred_fallthru
      _
    // Predicated region
    $region85: #{tpu_custom_call.1} parent=1 // pred_check
      _
    $region86: #{tpu_custom_call.1} parent=1 // pred_check_branch
      %588 = sbr.rel (0) target = $region88
    $region87: #{tpu_custom_call.1} parent=1 // pred_region
      %589 = dma.done [#allocation6], 32
    $region88: #{tpu_custom_call.1} parent=1 // pred_fallthru
      _
    // Predicated region
    $region89: #{tpu_custom_call.1} parent=1 // pred_check
      _
    $region90: #{tpu_custom_call.1} parent=1 // pred_check_branch
      %591 = sbr.rel (0) target = $region92
    $region91: #{tpu_custom_call.1} parent=1 // pred_region
      %592 = dma.done [#allocation9], 32
    $region92: #{tpu_custom_call.1} parent=1 // pred_fallthru
      _
    %593 = vsyncpa [#allocation4], 1
    %594 = vsyncpa [#allocation6], 1
    %595 = vsyncpa [#allocation9], 1

</llo_original>
